<compile_context>
chip_gen: v5e
topology: v5e:2x2
jax: 0.10.0
libtpu: 0.0.40
codegen_flags: <defaults>
</compile_context>

<pallas_src>
import functools

import jax
import jax.numpy as jnp
import numpy as np
from jax.experimental import pallas as pl
from jax.experimental.pallas import tpu as pltpu


def _channel_linear_kernel(x_ref, w_ref, b_ref, o_ref):
    # x_ref: (B, K)   w_ref: (Cb, K, N)   b_ref: (Cb, 1, N)   o_ref: (Cb, B, N)
    cb, _, _ = w_ref.shape
    bsz, k = x_ref.shape
    x = jnp.broadcast_to(x_ref[...][None, :, :], (cb, bsz, k))      # (Cb, B, K)
    acc = jnp.einsum(                                               # batched MXU dots
        "cbk,ckn->cbn", x, w_ref[...],
        preferred_element_type=jnp.float32)                         # (Cb, B, N) f32
    o_ref[...] = (acc + b_ref[...]).astype(o_ref.dtype)             # bias broadcasts over B


def _vmem_capacity_bytes():
    """Physical VMEM of the current chip; conservative fallback = v7x (64 MiB)."""
    try:
        return int(pltpu.get_tpu_info().vmem_capacity_bytes)
    except Exception:
        return 64 * 1024 * 1024


def _pick_channel_block(C, B, K, N, x_item, w_item, b_item, o_item, budget_bytes):
    """Largest divisor Cb of C whose *total* live VMEM footprint fits the budget.

    Counts every double-buffered block, not just the weight slab:
      2x weight (Cb,K,N) + 2x bias (Cb,1,N) + 2x output (Cb,B,N) + 2x obs (B,K).
    Also caps Cb at C/2 (when C > 1) so the parallel grid axis has >= 2 steps
    and v7x's two TensorCores can both be used.
    """
    def live_bytes(cb):
        return (2 * cb * K * N * w_item
                + 2 * cb * N * b_item
                + 2 * cb * B * N * o_item
                + 2 * B * K * x_item)

    cap = C if C == 1 else max(1, C // 2)
    best = 1
    for d in range(1, cap + 1):
        if C % d == 0 and live_bytes(d) <= budget_bytes:
            best = d
    # TODO(synk): if even Cb=1 exceeds the budget (huge K*N per channel), tile
    # the K and/or N axes as additional grid dimensions.
    return best


@functools.partial(jax.jit, static_argnames=())
def linear_with_channel(observations, weight, bias):
    """observations: (B, K); weight: (C, K, N); bias: (C, 1, N) -> (C, B, N)."""
    B, K = observations.shape
    C, _, N = weight.shape

    x_item = jnp.dtype(observations.dtype).itemsize
    w_item = jnp.dtype(weight.dtype).itemsize
    b_item = jnp.dtype(bias.dtype).itemsize
    out_dtype = jnp.result_type(observations.dtype, weight.dtype)
    o_item = jnp.dtype(out_dtype).itemsize

    # Generation-aware VMEM budget: 3/4 of physical (48 MiB v7x, 96 MiB v5e/v6e),
    # minus headroom for compiler scratch / semaphores when sizing blocks.
    vmem_cap = _vmem_capacity_bytes()
    vmem_limit = (vmem_cap * 3) // 4
    block_budget = max(vmem_limit - (4 << 20), 1 << 20)

    Cb = _pick_channel_block(C, B, K, N, x_item, w_item, b_item, o_item,
                             block_budget)
    grid = (C // Cb,)

    flops = 2 * B * K * C * N
    bytes_accessed = (B * K * x_item + C * K * N * w_item
                      + C * N * b_item + C * B * N * o_item)

    return pl.pallas_call(
        _channel_linear_kernel,
        out_shape=jax.ShapeDtypeStruct((C, B, N), out_dtype),
        grid_spec=pltpu.PrefetchScalarGridSpec(
            num_scalar_prefetch=0,
            grid=grid,
            in_specs=[
                # observations: same full (B, K) block every step (stays resident)
                pl.BlockSpec((B, K), lambda c: (0, 0)),
                # native-layout weight channels for this block (contiguous DMA)
                pl.BlockSpec((Cb, K, N), lambda c: (c, 0, 0)),
                # native-layout bias channels for this block
                pl.BlockSpec((Cb, 1, N), lambda c: (c, 0, 0)),
            ],
            # write (C, B, N) directly — no wrapper output transpose
            out_specs=pl.BlockSpec((Cb, B, N), lambda c: (c, 0, 0)),
        ),
        compiler_params=pltpu.CompilerParams(
            dimension_semantics=("parallel",),
            vmem_limit_bytes=int(vmem_limit),
        ),
        cost_estimate=pl.CostEstimate(
            flops=flops, transcendentals=0, bytes_accessed=bytes_accessed),
    )(observations, weight, bias)


def init_params(key, channel_size, input_size, output_size, dtype=jnp.float32):
    """Deterministic init mirroring the PyTorch module's reset_parameters.

    Pass dtype=jnp.bfloat16 to halve weight/bias HBM traffic (accumulation in
    the kernel stays float32).
    """
    kw, kb = jax.random.split(key)
    # kaiming_uniform_(a=sqrt(3)): gain = sqrt(2/(1+a^2)) = sqrt(0.5)
    # fan_in (PyTorch convention for a 3-D tensor) = size(1) * prod(size(2:))
    fan_in = input_size * output_size
    w_bound = np.sqrt(0.5) * np.sqrt(3.0 / fan_in)
    weight = jax.random.uniform(
        kw, (channel_size, input_size, output_size),
        minval=-w_bound, maxval=w_bound, dtype=jnp.float32).astype(dtype)
    b_bound = 1.0 / np.sqrt(fan_in)
    bias = jax.random.uniform(
        kb, (channel_size, 1, output_size),
        minval=-b_bound, maxval=b_bound, dtype=jnp.float32).astype(dtype)
    return weight, bias


if __name__ == "__main__":
    key = jax.random.PRNGKey(0)
    k_obs, k_params = jax.random.split(key)

    batch_size = 8
    input_size = 32
    output_size = 32
    channel_size = 4

    observations = jax.random.normal(
        k_obs, (batch_size, input_size), dtype=jnp.float32)
    weight, bias = init_params(k_params, channel_size, input_size, output_size)

    out = linear_with_channel(observations, weight, bias)
    out = jax.block_until_ready(out)

    # Reference check against plain JAX (same math as torch.bmm + bias).
    ref = jnp.einsum("bk,ckn->cbn", observations, weight) + bias
    np.testing.assert_allclose(np.asarray(out), np.asarray(ref),
                               rtol=1e-5, atol=1e-5)
    assert out.shape == (channel_size, batch_size, output_size)

    print("KERNEL_OK")
</pallas_src>

<mosaic_0001>
module attributes {stable_mosaic.version = 11 : i64} {
  func.func @_channel_linear_kernel(%arg0: i32, %arg1: memref<8x32xf32, #tpu.memory_space<vmem>>, %arg2: memref<2x32x32xf32, #tpu.memory_space<vmem>>, %arg3: memref<2x1x32xf32, #tpu.memory_space<vmem>>, %arg4: memref<2x8x32xf32, #tpu.memory_space<vmem>>) attributes {dimension_semantics = [#tpu.dimension_semantics<parallel>], iteration_bounds = array<i64: 2>, scalar_prefetch = 0 : i64, scratch_operands = 0 : i64, tpu.core_type = #tpu.core_type<tc>, window_params = [{pipeline_mode = #tpu.pipeline_mode<synchronous>, transform_indices = @transform_0, window_bounds = array<i64: 8, 32>}, {transform_indices = @transform_1, window_bounds = array<i64: 2, 32, 32>}, {transform_indices = @transform_2, window_bounds = array<i64: 2, 1, 32>}, {transform_indices = @transform_3, window_bounds = array<i64: 2, 8, 32>}]} {
    %c0 = arith.constant 0 : index
    %c0_0 = arith.constant 0 : index
    %0 = vector.load %arg1[%c0, %c0_0] : memref<8x32xf32, #tpu.memory_space<vmem>>, vector<8x32xf32>
    %1 = vector.shape_cast %0 : vector<8x32xf32> to vector<1x8x32xf32>
    %2 = vector.shape_cast %1 : vector<1x8x32xf32> to vector<1x8x32xf32>
    %3 = vector.broadcast %2 : vector<1x8x32xf32> to vector<2x8x32xf32>
    %c0_1 = arith.constant 0 : index
    %c0_2 = arith.constant 0 : index
    %c0_3 = arith.constant 0 : index
    %4 = vector.load %arg2[%c0_1, %c0_2, %c0_3] : memref<2x32x32xf32, #tpu.memory_space<vmem>>, vector<2x32x32xf32>
    "tpu.trace_start"() <{level = 10 : i32, message = "cbk,ckn->cbn"}> : () -> ()
    %cst = arith.constant dense<0.000000e+00> : vector<2x8x32xf32>
    %5 = tpu.matmul %3, %4, %cst {dimension_numbers = #tpu.dot_dimension_numbers<[2], [1], [1], [2], [0, 0, 0, 1, 1, 2], [0], [0]>} : vector<2x8x32xf32>, vector<2x32x32xf32>, vector<2x8x32xf32> -> vector<2x8x32xf32>
    "tpu.trace_stop"() : () -> ()
    %c0_4 = arith.constant 0 : index
    %c0_5 = arith.constant 0 : index
    %c0_6 = arith.constant 0 : index
    %6 = vector.load %arg3[%c0_4, %c0_5, %c0_6] : memref<2x1x32xf32, #tpu.memory_space<vmem>>, vector<2x1x32xf32>
    %7 = vector.broadcast %6 : vector<2x1x32xf32> to vector<2x8x32xf32>
    %8 = arith.addf %5, %7 : vector<2x8x32xf32>
    %c0_7 = arith.constant 0 : index
    %c0_8 = arith.constant 0 : index
    %c0_9 = arith.constant 0 : index
    %9 = vector.load %arg4[%c0_7, %c0_8, %c0_9] : memref<2x8x32xf32, #tpu.memory_space<vmem>>, vector<2x8x32xf32>
    tpu.vector_store %arg4[%c0_7, %c0_8, %c0_9], %8 {strides = array<i32>} : memref<2x8x32xf32, #tpu.memory_space<vmem>>, vector<2x8x32xf32>,
    return
  }
  func.func @transform_0(%arg0: i32) -> (i32, i32) {
    %c0_i32 = arith.constant 0 : i32
    %c0_i32_0 = arith.constant 0 : i32
    %c0_i32_1 = arith.constant 0 : i32
    return %c0_i32, %c0_i32_0 : i32, i32
  }
  func.func @transform_1(%arg0: i32) -> (i32, i32, i32) {
    %c0_i32 = arith.constant 0 : i32
    %c0_i32_0 = arith.constant 0 : i32
    %c0_i32_1 = arith.constant 0 : i32
    return %arg0, %c0_i32, %c0_i32_0 : i32, i32, i32
  }
  func.func @transform_2(%arg0: i32) -> (i32, i32, i32) {
    %c0_i32 = arith.constant 0 : i32
    %c0_i32_0 = arith.constant 0 : i32
    %c0_i32_1 = arith.constant 0 : i32
    return %arg0, %c0_i32, %c0_i32_0 : i32, i32, i32
  }
  func.func @transform_3(%arg0: i32) -> (i32, i32, i32) {
    %c0_i32 = arith.constant 0 : i32
    %c0_i32_0 = arith.constant 0 : i32
    %c0_i32_1 = arith.constant 0 : i32
    return %arg0, %c0_i32, %c0_i32_0 : i32, i32, i32
  }
}

</mosaic_0001>

<llo_original>
// kernel: linear_with_channel.1
$region0: #{linear_with_channel.1}
  #allocation0 [shape = 'u32[]', space=smem, size = 0x4, offset = 0x4, fixed_abs, tag = 'smem constant byte address 0x4 - core index']
  #allocation1 [shape = 'u32[72,128]{1,0:T(1,128)}', space=vmem, size = 0x9000, scoped, tag = 'internal scratch']
  %s0 = inlined_call_operand.hbm [shape: f32[8,32], index: 0, kind: input, shape index: {}]
  %s1 = inlined_call_operand.hbm [shape: f32[4,32,32], index: 1, kind: input, shape index: {}]
  %s2 = inlined_call_operand.hbm [shape: f32[4,1,32], index: 2, kind: input, shape index: {}]
  %s3 = inlined_call_operand.hbm [shape: f32[4,8,32], index: 3, kind: output, shape index: {}]
  %s4 = sld [smem:[#allocation0]]
  $region57: #{linear_with_channel.1} parent=0
    _
  %s6 = ssub.s32 1, %s4
  %s7 = scalar_select 0, %s6, %s4
  $region1: #{linear_with_channel.1} parent=0
    #allocation2 [shape = 'u8[4096]{0}', space=vmem, size = 0x1000, scoped, tag = 'input window, operand 0, single buffered']
    #allocation3 [shape = 's32[2]{0}', space=sflag, size = 0x8, scoped, tag = 'scoped memory for linear_with_channel.1']
    #allocation4 [shape = 's32[2]{0}', space=sflag, size = 0x8, scoped, tag = 'scoped memory for linear_with_channel.1']
    #allocation5 [shape = 'u8[65536]{0}', space=vmem, size = 0x10000, scoped, tag = 'input window, operand 1']
    #allocation6 [shape = 's32[2]{0}', space=sflag, size = 0x8, scoped, tag = 'scoped memory for linear_with_channel.1']
    #allocation7 [shape = 'u8[2048]{0}', space=vmem, size = 0x800, scoped, tag = 'input window, operand 2']
    #allocation8 [shape = 'u8[16384]{0}', space=vmem, size = 0x4000, scoped, tag = 'output window, operand 0']
    %8 = vsyncpa [#allocation3], 0
    %9 = vsyncpa [#allocation6], 0
    %s10 = scalar_lea.sflag [#allocation6], 1
    %11 = vsyncpa %s10, 0
    %12 = vsyncpa [#allocation4], 0
    %s13 = scalar_lea.sflag [#allocation4], 1
    %14 = vsyncpa %s13, 0
    loop: start=0, step=1, limit=4
    $region2: #{linear_with_channel.1} parent=1 // loop_pre_header
      _
    $region3: #{linear_with_channel.1} parent=1 // loop_header
      %s16 = sphi 0, %s20
      %p17 = scmp.ge.s32.totalorder %s16, 4
      %s24 = sphi 0, %s24
      %s26 = sphi 0, %s24
      %s27 = sphi 0, %s26
      %s41 = sphi 0, %s27
      %s47 = sphi 0, %s49
      %s50 = sphi 0, %s47
      %s51 = sphi 0, %s50
      %s67 = sphi 0, %s51
      %s73 = sphi 0, %s75
      %s76 = sphi 0, %s73
      %s77 = sphi 0, %s76
      %s93 = sphi 0, %s77
      %s99 = sphi 0, %s101
      %s102 = sphi 0, %s99
      %s103 = sphi 0, %s102
      %s119 = sphi 0, %s103
    $region4: #{linear_with_channel.1} parent=1 // loop_header_branch
      %19 = sbr.rel (%p17) target = $region8
    $region5: #{linear_with_channel.1} parent=1 // loop_body
      %s21 = ssub.s32 %s16, 1
      %s22 = ssub.s32 %s16, 2
      %s23 = sadd.s32 %s16, 1
      %s25 = sadd.s32 %s24, 1
      %p28 = scmp.eq.s32.totalorder %s16, 1
      %p29 = scmp.ne.s32.totalorder %s24, %s26
      %p30 = scmp.eq.s32.totalorder %s16, 0
      %p31 = por %p29, %p30
      %p32 = scmp.ne.s32.totalorder %s24, %s26
      %p33 = scmp.eq.s32.totalorder %s21, 1
      %p34 = por %p32, %p33
      %p35 = scmp.ne.s32.totalorder %s26, %s27
      %p36 = scmp.eq.s32.totalorder %s21, 0
      %p37 = por %p35, %p36
      %p38 = scmp.ne.s32.totalorder %s26, %s27
      %p39 = scmp.eq.s32.totalorder %s22, 1
      %p40 = por %p38, %p39
      %p42 = scmp.ne.s32.totalorder %s27, %s41
      %p43 = scmp.eq.s32.totalorder %s22, 0
      %p44 = por %p42, %p43
      %s45 = ssub.s32 %s16, %s23
      %p46 = scmp.eq.s32.totalorder %s45, 0
      %s48 = sadd.s32 %s47, 1
      %s49 = scalar_select %p46, %s47, %s48
      %p52 = pneg %p46
      %p53 = scmp.eq.s32.totalorder %s16, 1
      %p54 = por %p52, %p53
      %p55 = scmp.ne.s32.totalorder %s47, %s50
      %p56 = scmp.eq.s32.totalorder %s16, 0
      %p57 = por %p55, %p56
      %p58 = scmp.ne.s32.totalorder %s47, %s50
      %p59 = scmp.eq.s32.totalorder %s21, 1
      %p60 = por %p58, %p59
      %p61 = scmp.ne.s32.totalorder %s50, %s51
      %p62 = scmp.eq.s32.totalorder %s21, 0
      %p63 = por %p61, %p62
      %p64 = scmp.ne.s32.totalorder %s50, %s51
      %p65 = scmp.eq.s32.totalorder %s22, 1
      %p66 = por %p64, %p65
      %p68 = scmp.ne.s32.totalorder %s51, %s67
      %p69 = scmp.eq.s32.totalorder %s22, 0
      %p70 = por %p68, %p69
      %s71 = ssub.s32 %s16, %s23
      %p72 = scmp.eq.s32.totalorder %s71, 0
      %s74 = sadd.s32 %s73, 1
      %s75 = scalar_select %p72, %s73, %s74
      %p78 = pneg %p72
      %p79 = scmp.eq.s32.totalorder %s16, 1
      %p80 = por %p78, %p79
      %p81 = scmp.ne.s32.totalorder %s73, %s76
      %p82 = scmp.eq.s32.totalorder %s16, 0
      %p83 = por %p81, %p82
      %p84 = scmp.ne.s32.totalorder %s73, %s76
      %p85 = scmp.eq.s32.totalorder %s21, 1
      %p86 = por %p84, %p85
      %p87 = scmp.ne.s32.totalorder %s76, %s77
      %p88 = scmp.eq.s32.totalorder %s21, 0
      %p89 = por %p87, %p88
      %p90 = scmp.ne.s32.totalorder %s76, %s77
      %p91 = scmp.eq.s32.totalorder %s22, 1
      %p92 = por %p90, %p91
      %p94 = scmp.ne.s32.totalorder %s77, %s93
      %p95 = scmp.eq.s32.totalorder %s22, 0
      %p96 = por %p94, %p95
      %s97 = ssub.s32 %s16, %s23
      %p98 = scmp.eq.s32.totalorder %s97, 0
      %s100 = sadd.s32 %s99, 1
      %s101 = scalar_select %p98, %s99, %s100
      %p104 = pneg %p98
      %p105 = scmp.eq.s32.totalorder %s16, 1
      %p106 = por %p104, %p105
      %p107 = scmp.ne.s32.totalorder %s99, %s102
      %p108 = scmp.eq.s32.totalorder %s16, 0
      %p109 = por %p107, %p108
      %p110 = scmp.ne.s32.totalorder %s99, %s102
      %p111 = scmp.eq.s32.totalorder %s21, 1
      %p112 = por %p110, %p111
      %p113 = scmp.ne.s32.totalorder %s102, %s103
      %p114 = scmp.eq.s32.totalorder %s21, 0
      %p115 = por %p113, %p114
      %p116 = scmp.ne.s32.totalorder %s102, %s103
      %p117 = scmp.eq.s32.totalorder %s22, 1
      %p118 = por %p116, %p117
      %p120 = scmp.ne.s32.totalorder %s103, %s119
      %p121 = scmp.eq.s32.totalorder %s22, 0
      %p122 = por %p120, %p121
      %p123 = scmp.le.s32.totalorder 1, %s16
      %p124 = scmp.lt.s32.totalorder %s16, 3
      %p125 = pnand %p123, %p124
      %p126 = pneg %p125
      // Predicated region
      $region9: #{linear_with_channel.1} parent=5 // pred_check
        _
      $region10: #{linear_with_channel.1} parent=5 // pred_check_branch
        %128 = sbr.rel (%p125) target = $region12
      $region11: #{linear_with_channel.1} parent=5 // pred_region
        %s129 = ssub.s32 %s16, 1
        // Predicated region
        $region13: #{linear_with_channel.1} parent=11 // pred_check
          %p130 = pneg %p37
        $region14: #{linear_with_channel.1} parent=11 // pred_check_branch
          %132 = sbr.rel (%p130) target = $region16
        $region15: #{linear_with_channel.1} parent=11 // pred_region
          %134 = vsyncadd [#allocation3], 0
          %s136 = sshll.u32 %s0, 4
          %s137 = int_to_ptr.hbm [resolvable:$true] %s136
          %s138 = sshll.u32 [#allocation2], 4
          %s139 = int_to_ptr.vmem [resolvable:$true] %s138
          %141 = dma.hbm_to_vmem [thread:$0]  %s137, 128, %s139, [#allocation3]
        $region16: #{linear_with_channel.1} parent=11 // pred_fallthru
          _
      $region12: #{linear_with_channel.1} parent=5 // pred_fallthru
        _
      %p142 = scmp.lt.s32.totalorder %s16, 2
      // Predicated region
      $region17: #{linear_with_channel.1} parent=5 // pred_check
        %p143 = pneg %p142
      $region18: #{linear_with_channel.1} parent=5 // pred_check_branch
        %145 = sbr.rel (%p143) target = $region20
      $region19: #{linear_with_channel.1} parent=5 // pred_region
        // Predicated region
        $region21: #{linear_with_channel.1} parent=19 // pred_check
          %p146 = pneg %p57
        $region22: #{linear_with_channel.1} parent=19 // pred_check_branch
          %148 = sbr.rel (%p146) target = $region24
        $region23: #{linear_with_channel.1} parent=19 // pred_region
          %s149 = sand.u32 %s16, 1
          %s150 = scalar_lea.sflag [#allocation6], %s149
          %s151 = sand.u32 %s47, 1
          %s152 = smul.addr %s151, 64
          %s153 = scalar_lea.vmem [#allocation5], %s152
          %s154 = smul.u32 2, %s16
          %156 = vsyncadd %s150, 0
          %s157 = smul.addr %s154, 4
          %s158 = smul.addr %s157, 8
          %s159 = scalar_lea.hbm %s1, %s158
          %s160 = sshll.u32 %s159, 4
          %s161 = int_to_ptr.hbm [resolvable:$true] %s160
          %s162 = sshll.u32 %s153, 4
          %s163 = int_to_ptr.vmem [resolvable:$true] %s162
          %168 = dma.hbm_to_vmem [thread:$0]  %s161, 1024, %s163, %s150, 128, 128, 8
        $region24: #{linear_with_channel.1} parent=19 // pred_fallthru
          _
        // Predicated region
        $region25: #{linear_with_channel.1} parent=19 // pred_check
          %p169 = pneg %p83
        $region26: #{linear_with_channel.1} parent=19 // pred_check_branch
          %171 = sbr.rel (%p169) target = $region28
        $region27: #{linear_with_channel.1} parent=19 // pred_region
          %s172 = sand.u32 %s16, 1
          %s173 = scalar_lea.sflag [#allocation6], %s172
          %s174 = sand.u32 %s73, 1
          %s175 = smul.addr %s174, 2
          %s176 = scalar_lea.vmem [#allocation7], %s175
          %s177 = smul.u32 2, %s16
          %179 = vsyncadd %s173, 0
          %s180 = scalar_lea.hbm %s2, %s177
          %s181 = sshll.u32 %s180, 4
          %s182 = int_to_ptr.hbm [resolvable:$true] %s181
          %s183 = sshll.u32 %s176, 4
          %s184 = int_to_ptr.vmem [resolvable:$true] %s183
          %189 = dma.hbm_to_vmem [thread:$0]  %s182, 32, %s184, %s173, 16, 16, 1
        $region28: #{linear_with_channel.1} parent=19 // pred_fallthru
          _
      $region20: #{linear_with_channel.1} parent=5 // pred_fallthru
        _
      %p190 = scmp.le.s32.totalorder 1, %s16
      %p191 = scmp.lt.s32.totalorder %s16, 3
      %p192 = pnand %p190, %p191
      %p193 = pneg %p192
      // Predicated region
      $region29: #{linear_with_channel.1} parent=5 // pred_check
        _
      $region30: #{linear_with_channel.1} parent=5 // pred_check_branch
        %195 = sbr.rel (%p192) target = $region32
      $region31: #{linear_with_channel.1} parent=5 // pred_region
        %s196 = ssub.s32 %s16, 1
        // Predicated region
        $region33: #{linear_with_channel.1} parent=31 // pred_check
          %p197 = pneg %p37
        $region34: #{linear_with_channel.1} parent=31 // pred_check_branch
          %199 = sbr.rel (%p197) target = $region36
        $region35: #{linear_with_channel.1} parent=31 // pred_region
          %201 = dma.done [#allocation3], 128
        $region36: #{linear_with_channel.1} parent=31 // pred_fallthru
          _
        %s202 = sand.u32 %s21, 1
        %s203 = scalar_lea.sflag [#allocation6], %s202
        %s204 = sand.u32 %s50, 1
        %s205 = smul.addr %s204, 64
        %s206 = scalar_lea.vmem [#allocation5], %s205
        // Predicated region
        $region37: #{linear_with_channel.1} parent=31 // pred_check
          %p207 = pneg %p63
        $region38: #{linear_with_channel.1} parent=31 // pred_check_branch
          %209 = sbr.rel (%p207) target = $region40
        $region39: #{linear_with_channel.1} parent=31 // pred_region
          %211 = dma.done %s203, 1024
        $region40: #{linear_with_channel.1} parent=31 // pred_fallthru
          _
        %s212 = sand.u32 %s21, 1
        %s213 = scalar_lea.sflag [#allocation6], %s212
        %s214 = sand.u32 %s76, 1
        %s215 = smul.addr %s214, 2
        %s216 = scalar_lea.vmem [#allocation7], %s215
        // Predicated region
        $region41: #{linear_with_channel.1} parent=31 // pred_check
          %p217 = pneg %p89
        $region42: #{linear_with_channel.1} parent=31 // pred_check_branch
          %219 = sbr.rel (%p217) target = $region44
        $region43: #{linear_with_channel.1} parent=31 // pred_region
          %221 = dma.done %s213, 32
        $region44: #{linear_with_channel.1} parent=31 // pred_fallthru
          _
        %p222 = pneg %p37
        %p223 = pneg %p34
        %s224 = sand.u32 %s21, 1
        %s225 = scalar_lea.sflag [#allocation6], %s224
        %s226 = sand.u32 %s50, 1
        %s227 = smul.addr %s226, 64
        %s228 = scalar_lea.vmem [#allocation5], %s227
        %p229 = pneg %p63
        %p230 = pneg %p60
        %s231 = sand.u32 %s21, 1
        %s232 = scalar_lea.sflag [#allocation6], %s231
        %s233 = sand.u32 %s76, 1
        %s234 = smul.addr %s233, 2
        %s235 = scalar_lea.vmem [#allocation7], %s234
        %p236 = pneg %p89
        %p237 = pneg %p86
        %p238 = pneg %p115
        %p239 = pneg %p112
        %s240 = sand.u32 %s102, 1
        %s241 = scalar_lea.sflag [#allocation4], %s240
        %s242 = sand.u32 %s102, 1
        %s243 = smul.addr %s242, 16
        %s244 = scalar_lea.vmem [#allocation8], %s243
        %s245 = smul.u32 2, %s21
        %s246 = smul.u32 2, %s21
        %s247 = smul.u32 2, %s21
        %v248 = vld [vmem:[#allocation2] sm:$0xff]
        %v249 = vld [vmem:[%s206] sm:$0xff]
        %v250 = vld [vmem:[%s206 + $0x8] sm:$0xff]
        %v251 = vld [vmem:[%s206 + $0x10] sm:$0xff]
        %v252 = vld [vmem:[%s206 + $0x18] sm:$0xff]
        %v253 = vld [vmem:[%s206 + $0x20] sm:$0xff]
        %v254 = vld [vmem:[%s206 + $0x28] sm:$0xff]
        %v255 = vld [vmem:[%s206 + $0x30] sm:$0xff]
        %v256 = vld [vmem:[%s206 + $0x38] sm:$0xff]
        %v257 = vld [vmem:[%s216] sm:$0x1]
        %v258 = vld [vmem:[%s216 + $0x1] sm:$0x1]
        %v261 = vperm.slane %v257, 0
        %v262 = vperm.slane %v258, 0
        %vm265 = vcmask 261120
        %v267 = vsel %vm265, %v248, 0
        %269 = vmatpush.msra.mxu0 0.0
        %270 = vmatpush.msra.mxu0 0.0
        %271 = vmatpush.msra.mxu0 0.0
        %272 = vmatpush.msra.mxu0 0.0
        %273 = vmatpush.msra.mxu0 0.0
        %274 = vmatpush.msra.mxu0 0.0
        %275 = vmatpush.msra.mxu0 0.0
        %276 = vmatpush.msra.mxu0 0.0
        %277 = vmatpush.msra.mxu0 0.0
        %278 = vmatpush.msra.mxu0 0.0
        %279 = vmatpush.msra.mxu0 0.0
        %280 = vmatpush.msra.mxu0 0.0
        %281 = vmatpush.msra.mxu0 %v252
        %282 = vmatpush.msra.mxu0 %v251
        %283 = vmatpush.msra.mxu0 %v250
        %284 = vmatpush.msra.mxu0 %v249
        %285 = vmatmul.f32.gmra.mxu0 %v267
        %v286 = vpop.f32.mrf.mxu0
        %v287 = vadd.f32 %v261, %v286
        %288 = vdwg.mxu0
        %289 = vmatpush.msra.mxu0 0.0
        %290 = vmatpush.msra.mxu0 0.0
        %291 = vmatpush.msra.mxu0 0.0
        %292 = vmatpush.msra.mxu0 0.0
        %293 = vmatpush.msra.mxu0 0.0
        %294 = vmatpush.msra.mxu0 0.0
        %295 = vmatpush.msra.mxu0 0.0
        %296 = vmatpush.msra.mxu0 0.0
        %297 = vmatpush.msra.mxu0 0.0
        %298 = vmatpush.msra.mxu0 0.0
        %299 = vmatpush.msra.mxu0 0.0
        %300 = vmatpush.msra.mxu0 0.0
        %301 = vmatpush.msra.mxu0 %v256
        %302 = vmatpush.msra.mxu0 %v255
        %303 = vmatpush.msra.mxu0 %v254
        %304 = vmatpush.msra.mxu0 %v253
        %305 = vmatmul.f32.gmra.mxu0 %v267
        %v306 = vpop.f32.mrf.mxu0
        %v307 = vadd.f32 %v262, %v306
        %308 = vdwg.mxu0
        %309 = vst.msk [vmem:[%s244] sm:$0xff] %vm265, %v287
        %310 = vst.msk [vmem:[%s244 + $0x8] sm:$0xff] %vm265, %v307
        %s311 = sand.u32 %s102, 1
        %s312 = scalar_lea.sflag [#allocation4], %s311
        %s313 = sand.u32 %s102, 1
        %s314 = smul.addr %s313, 16
        %s315 = scalar_lea.vmem [#allocation8], %s314
        // Predicated region
        $region45: #{linear_with_channel.1} parent=31 // pred_check
          %p316 = pneg %p112
        $region46: #{linear_with_channel.1} parent=31 // pred_check_branch
          %318 = sbr.rel (%p316) target = $region48
        $region47: #{linear_with_channel.1} parent=31 // pred_region
          %s319 = smul.u32 2, %s21
          %321 = vsyncadd %s312, 0
          %s322 = smul.addr %s319, 8
          %s323 = scalar_lea.hbm %s3, %s322
          %s324 = sshll.u32 %s315, 4
          %s325 = int_to_ptr.vmem [resolvable:$true] %s324
          %s326 = sshll.u32 %s323, 4
          %s327 = int_to_ptr.hbm [resolvable:$true] %s326
          %332 = dma.vmem_to_hbm [thread:$0]  %s325, 256, %s327, %s312, 128, 128, 8
        $region48: #{linear_with_channel.1} parent=31 // pred_fallthru
          _
      $region32: #{linear_with_channel.1} parent=5 // pred_fallthru
        _
      %p333 = scmp.le.s32.totalorder 2, %s16
      // Predicated region
      $region49: #{linear_with_channel.1} parent=5 // pred_check
        %p334 = pneg %p333
      $region50: #{linear_with_channel.1} parent=5 // pred_check_branch
        %336 = sbr.rel (%p334) target = $region52
      $region51: #{linear_with_channel.1} parent=5 // pred_region
        %s337 = ssub.s32 %s16, 2
        // Predicated region
        $region53: #{linear_with_channel.1} parent=51 // pred_check
          %p338 = pneg %p118
        $region54: #{linear_with_channel.1} parent=51 // pred_check_branch
          %340 = sbr.rel (%p338) target = $region56
        $region55: #{linear_with_channel.1} parent=51 // pred_region
          %s341 = sand.u32 %s103, 1
          %s342 = scalar_lea.sflag [#allocation4], %s341
          %s343 = sand.u32 %s103, 1
          %s344 = smul.addr %s343, 16
          %s345 = scalar_lea.vmem [#allocation8], %s344
          %347 = dma.done %s342, 256
        $region56: #{linear_with_channel.1} parent=51 // pred_fallthru
          _
      $region52: #{linear_with_channel.1} parent=5 // pred_fallthru
        _
    $region6: #{linear_with_channel.1} parent=1 // loop_footer
      %s20 = sadd.s32 1, %s16
    $region7: #{linear_with_channel.1} parent=1 // loop_footer_branch
      %15 = sbr.rel target = $region3
    $region8: #{linear_with_channel.1} parent=1 // loop_exit
      _
    %348 = vsyncpa [#allocation3], 1
    %s349 = scalar_lea.sflag [#allocation3], 1
    %350 = vsyncpa %s349, 1
    %351 = vsyncpa [#allocation6], 1
    %s352 = scalar_lea.sflag [#allocation6], 1
    %353 = vsyncpa %s352, 1
    %354 = vsyncpa [#allocation4], 1
    %s355 = scalar_lea.sflag [#allocation4], 1
    %356 = vsyncpa %s355, 1

</llo_original>
